<compile_context>
chip_gen: v7x
topology: tpu7x:2x2x1
jax: 0.10.0
libtpu: 0.0.40
codegen_flags: <defaults>
</compile_context>

<pallas_src>
import jax
import jax.numpy as jnp
import numpy as np
from jax.experimental import pallas as pl
from jax.experimental.pallas import tpu as pltpu

POOL = 4


# ------------------------- host-side constants -------------------------------
def _pool_matrix(n_in, n_out):
    """(n_out, n_in) matrix M with (M @ x) = average over each POOL-sized block."""
    m = np.zeros((n_out, n_in), np.float32)
    m[np.arange(n_in) // POOL, np.arange(n_in)] = 1.0 / POOL
    return m


def _shift_prev(n):
    """x @ M -> x[:, j-1] with zero at j == 0 (superdiagonal)."""
    m = np.zeros((n, n), np.float32)
    if n > 1:
        m[np.arange(n - 1), np.arange(1, n)] = 1.0
    return m


def _shift_next(n):
    """x @ M -> x[:, j+1] with zero at j == n-1 (subdiagonal)."""
    m = np.zeros((n, n), np.float32)
    if n > 1:
        m[np.arange(1, n), np.arange(n - 1)] = 1.0
    return m


# --------------------------------- kernel ------------------------------------
def l_spa_kernel(org_ref, enh_ref, ph_ref, pw_ref, wl_ref, wr_ref,
                 hu_ref, hd_ref, out_ref):
    f32 = jnp.float32

    # Fused channel-mean of the difference (linearity: mean/pool/conv all
    # commute with the org - enhance subtraction).
    d = jnp.mean(org_ref[0].astype(f32) - enh_ref[0].astype(f32), axis=0)  # (H, W)

    # 4x4 average pooling as two small matmuls with precomputed factors.
    p = jnp.dot(jnp.dot(ph_ref[...], d, preferred_element_type=f32),
                pw_ref[...], preferred_element_type=f32)                    # (Hp, Wp)

    # Directional diffs with zero-padded neighbours (== conv2d padding=1):
    #   left : p[i,j] - p[i,j-1]    right: p[i,j] - p[i,j+1]
    #   up   : p[i,j] - p[i-1,j]    down : p[i,j] - p[i+1,j]
    left = p - jnp.dot(p, wl_ref[...], preferred_element_type=f32)
    right = p - jnp.dot(p, wr_ref[...], preferred_element_type=f32)
    up = p - jnp.dot(hu_ref[...], p, preferred_element_type=f32)
    down = p - jnp.dot(hd_ref[...], p, preferred_element_type=f32)

    e = left * left + right * right + up * up + down * down
    # TODO(synk): weight_diff / E_1 in the torch forward are dead code (never
    # used in the returned E), so they are intentionally not computed.
    out_ref[0] = e.astype(out_ref.dtype)


# -------------------------------- wrapper -------------------------------------
def l_spa(org, enhance):
    B, C, H, W = org.shape
    assert H % POOL == 0 and W % POOL == 0
    Hp, Wp = H // POOL, W // POOL

    ph = jnp.asarray(_pool_matrix(H, Hp))        # (Hp, H): row pooling
    pw = jnp.asarray(_pool_matrix(W, Wp).T)      # (W, Wp): column pooling
    wl = jnp.asarray(_shift_prev(Wp))            # x @ wl -> x[:, j-1]
    wr = jnp.asarray(_shift_next(Wp))            # x @ wr -> x[:, j+1]
    hu = jnp.asarray(_shift_next(Hp))            # hu @ x -> x[i-1, :]
    hd = jnp.asarray(_shift_prev(Hp))            # hd @ x -> x[i+1, :]

    # Memory-bound kernel: budget VMEM explicitly (two double-buffered input
    # blocks dominate).
    # TODO(synk): for very large frames (4*C*H*W*4 bytes beyond ~48 MiB) tile H
    # with a 4-row halo instead of loading whole images per grid step.
    block_bytes = C * H * W * 4
    const_bytes = (Hp * H + W * Wp + 2 * Wp * Wp + 2 * Hp * Hp) * 4
    needed = 4 * block_bytes + 2 * const_bytes + 2 * Hp * Wp * 4 + (1 << 20)
    vmem_limit = int(min(max(needed, 32 * 2**20), 48 * 2**20))

    cost = pl.CostEstimate(
        flops=int(B * (2 * C * H * W + 2 * Hp * H * W + 2 * Hp * W * Wp
                       + 8 * Hp * Wp * Wp + 8 * Hp * Hp * Wp + 12 * Hp * Wp)),
        transcendentals=0,
        bytes_accessed=int(2 * B * C * H * W * 4 + B * Hp * Wp * 4 + const_bytes),
    )

    out = pl.pallas_call(
        l_spa_kernel,
        out_shape=jax.ShapeDtypeStruct((B, Hp, Wp), jnp.float32),
        grid_spec=pltpu.PrefetchScalarGridSpec(
            num_scalar_prefetch=0,
            grid=(B,),
            in_specs=[
                pl.BlockSpec((1, C, H, W), lambda b: (b, 0, 0, 0)),
                pl.BlockSpec((1, C, H, W), lambda b: (b, 0, 0, 0)),
                # Constants: full-array blocks, constant index_map -> DMA'd
                # once and revisited for every grid step.
                pl.BlockSpec((Hp, H), lambda b: (0, 0)),
                pl.BlockSpec((W, Wp), lambda b: (0, 0)),
                pl.BlockSpec((Wp, Wp), lambda b: (0, 0)),
                pl.BlockSpec((Wp, Wp), lambda b: (0, 0)),
                pl.BlockSpec((Hp, Hp), lambda b: (0, 0)),
                pl.BlockSpec((Hp, Hp), lambda b: (0, 0)),
            ],
            out_specs=pl.BlockSpec((1, Hp, Wp), lambda b: (b, 0, 0)),
        ),
        compiler_params=pltpu.CompilerParams(
            dimension_semantics=("parallel",),
            vmem_limit_bytes=vmem_limit,
        ),
        cost_estimate=cost,
    )(org, enhance, ph, pw, wl, wr, hu, hd)

    # Match the torch output layout (B, 1, H//4, W//4).
    return out.reshape(B, 1, Hp, Wp)


# ------------------------------ pure-JAX reference ----------------------------
def l_spa_ref(org, enhance):
    # Mirrors the torch forward (unfused) to independently validate the
    # linearity rewrite used inside the kernel.
    om = jnp.mean(org, axis=1, keepdims=True)
    em = jnp.mean(enhance, axis=1, keepdims=True)

    def pool(x):
        B, _, H, W = x.shape
        return x.reshape(B, 1, H // POOL, POOL, W // POOL, POOL).mean(axis=(3, 5))

    op, ep = pool(om), pool(em)

    def grads(x):
        xp = jnp.pad(x, ((0, 0), (0, 0), (1, 1), (1, 1)))
        left = x - xp[:, :, 1:-1, :-2]
        right = x - xp[:, :, 1:-1, 2:]
        up = x - xp[:, :, :-2, 1:-1]
        down = x - xp[:, :, 2:, 1:-1]
        return left, right, up, down

    ol, orr, ou, od = grads(op)
    el, er, eu, ed = grads(ep)
    return (ol - el) ** 2 + (orr - er) ** 2 + (ou - eu) ** 2 + (od - ed) ** 2


if __name__ == "__main__":
    key = jax.random.PRNGKey(0)
    k1, k2 = jax.random.split(key)
    B, C, H, W = 2, 4, 16, 16
    org = jax.random.uniform(k1, (B, C, H, W), dtype=jnp.float32)
    enhance = jax.random.uniform(k2, (B, C, H, W), dtype=jnp.float32)

    out = l_spa(org, enhance)
    out = jax.block_until_ready(out)

    ref = l_spa_ref(org, enhance)
    np.testing.assert_allclose(np.asarray(out), np.asarray(ref),
                               rtol=1e-4, atol=1e-5)
    print("KERNEL_OK")
</pallas_src>

<mosaic_0001>
module attributes {stable_mosaic.version = 11 : i64} {
  func.func @l_spa_kernel(%arg0: i32, %arg1: memref<1x4x16x16xf32, #tpu.memory_space<vmem>>, %arg2: memref<1x4x16x16xf32, #tpu.memory_space<vmem>>, %arg3: memref<4x16xf32, #tpu.memory_space<vmem>>, %arg4: memref<16x4xf32, #tpu.memory_space<vmem>>, %arg5: memref<4x4xf32, #tpu.memory_space<vmem>>, %arg6: memref<4x4xf32, #tpu.memory_space<vmem>>, %arg7: memref<4x4xf32, #tpu.memory_space<vmem>>, %arg8: memref<4x4xf32, #tpu.memory_space<vmem>>, %arg9: memref<1x4x4xf32, #tpu.memory_space<vmem>>) attributes {dimension_semantics = [#tpu.dimension_semantics<parallel>], iteration_bounds = array<i64: 2>, scalar_prefetch = 0 : i64, scratch_operands = 0 : i64, tpu.core_type = #tpu.core_type<tc>, window_params = [{transform_indices = @transform_0, window_bounds = array<i64: 1, 4, 16, 16>}, {transform_indices = @transform_1, window_bounds = array<i64: 1, 4, 16, 16>}, {pipeline_mode = #tpu.pipeline_mode<synchronous>, transform_indices = @transform_2, window_bounds = array<i64: 4, 16>}, {pipeline_mode = #tpu.pipeline_mode<synchronous>, transform_indices = @transform_3, window_bounds = array<i64: 16, 4>}, {pipeline_mode = #tpu.pipeline_mode<synchronous>, transform_indices = @transform_4, window_bounds = array<i64: 4, 4>}, {pipeline_mode = #tpu.pipeline_mode<synchronous>, transform_indices = @transform_5, window_bounds = array<i64: 4, 4>}, {pipeline_mode = #tpu.pipeline_mode<synchronous>, transform_indices = @transform_6, window_bounds = array<i64: 4, 4>}, {pipeline_mode = #tpu.pipeline_mode<synchronous>, transform_indices = @transform_7, window_bounds = array<i64: 4, 4>}, {transform_indices = @transform_8, window_bounds = array<i64: 1, 4, 4>}]} {
    %c0 = arith.constant 0 : index
    %c0_0 = arith.constant 0 : index
    %c0_1 = arith.constant 0 : index
    %c0_2 = arith.constant 0 : index
    %0 = vector.load %arg1[%c0, %c0_0, %c0_1, %c0_2] : memref<1x4x16x16xf32, #tpu.memory_space<vmem>>, vector<1x4x16x16xf32>
    %1 = vector.shape_cast %0 : vector<1x4x16x16xf32> to vector<4x16x16xf32>
    %c0_3 = arith.constant 0 : index
    %c0_4 = arith.constant 0 : index
    %c0_5 = arith.constant 0 : index
    %c0_6 = arith.constant 0 : index
    %2 = vector.load %arg2[%c0_3, %c0_4, %c0_5, %c0_6] : memref<1x4x16x16xf32, #tpu.memory_space<vmem>>, vector<1x4x16x16xf32>
    %3 = vector.shape_cast %2 : vector<1x4x16x16xf32> to vector<4x16x16xf32>
    %4 = arith.subf %1, %3 : vector<4x16x16xf32>
    %cst = arith.constant dense<0.000000e+00> : vector<16x16xf32>
    %5 = vector.multi_reduction <add>, %4, %cst [0] : vector<4x16x16xf32> to vector<16x16xf32>
    %cst_7 = arith.constant 4.000000e+00 : f32
    %6 = vector.broadcast %cst_7 : f32 to vector<16x16xf32>
    %7 = arith.divf %5, %6 : vector<16x16xf32>
    %c0_8 = arith.constant 0 : index
    %c0_9 = arith.constant 0 : index
    %8 = vector.load %arg3[%c0_8, %c0_9] : memref<4x16xf32, #tpu.memory_space<vmem>>, vector<4x16xf32>
    %cst_10 = arith.constant dense<0.000000e+00> : vector<4x16xf32>
    %9 = tpu.matmul %8, %7, %cst_10 {dimension_numbers = #tpu.dot_dimension_numbers<[1], [0], [0], [1], [0, 0, 1, 1], [], []>} : vector<4x16xf32>, vector<16x16xf32>, vector<4x16xf32> -> vector<4x16xf32>
    %c0_11 = arith.constant 0 : index
    %c0_12 = arith.constant 0 : index
    %10 = vector.load %arg4[%c0_11, %c0_12] : memref<16x4xf32, #tpu.memory_space<vmem>>, vector<16x4xf32>
    %cst_13 = arith.constant dense<0.000000e+00> : vector<4x4xf32>
    %11 = tpu.matmul %9, %10, %cst_13 {dimension_numbers = #tpu.dot_dimension_numbers<[1], [0], [0], [1], [0, 0, 1, 1], [], []>} : vector<4x16xf32>, vector<16x4xf32>, vector<4x4xf32> -> vector<4x4xf32>
    %c0_14 = arith.constant 0 : index
    %c0_15 = arith.constant 0 : index
    %12 = vector.load %arg5[%c0_14, %c0_15] : memref<4x4xf32, #tpu.memory_space<vmem>>, vector<4x4xf32>
    %cst_16 = arith.constant dense<0.000000e+00> : vector<4x4xf32>
    %13 = tpu.matmul %11, %12, %cst_16 {dimension_numbers = #tpu.dot_dimension_numbers<[1], [0], [0], [1], [0, 0, 1, 1], [], []>} : vector<4x4xf32>, vector<4x4xf32>, vector<4x4xf32> -> vector<4x4xf32>
    %14 = arith.subf %11, %13 : vector<4x4xf32>
    %c0_17 = arith.constant 0 : index
    %c0_18 = arith.constant 0 : index
    %15 = vector.load %arg6[%c0_17, %c0_18] : memref<4x4xf32, #tpu.memory_space<vmem>>, vector<4x4xf32>
    %cst_19 = arith.constant dense<0.000000e+00> : vector<4x4xf32>
    %16 = tpu.matmul %11, %15, %cst_19 {dimension_numbers = #tpu.dot_dimension_numbers<[1], [0], [0], [1], [0, 0, 1, 1], [], []>} : vector<4x4xf32>, vector<4x4xf32>, vector<4x4xf32> -> vector<4x4xf32>
    %17 = arith.subf %11, %16 : vector<4x4xf32>
    %c0_20 = arith.constant 0 : index
    %c0_21 = arith.constant 0 : index
    %18 = vector.load %arg7[%c0_20, %c0_21] : memref<4x4xf32, #tpu.memory_space<vmem>>, vector<4x4xf32>
    %cst_22 = arith.constant dense<0.000000e+00> : vector<4x4xf32>
    %19 = tpu.matmul %18, %11, %cst_22 {dimension_numbers = #tpu.dot_dimension_numbers<[1], [0], [0], [1], [0, 0, 1, 1], [], []>} : vector<4x4xf32>, vector<4x4xf32>, vector<4x4xf32> -> vector<4x4xf32>
    %20 = arith.subf %11, %19 : vector<4x4xf32>
    %c0_23 = arith.constant 0 : index
    %c0_24 = arith.constant 0 : index
    %21 = vector.load %arg8[%c0_23, %c0_24] : memref<4x4xf32, #tpu.memory_space<vmem>>, vector<4x4xf32>
    %cst_25 = arith.constant dense<0.000000e+00> : vector<4x4xf32>
    %22 = tpu.matmul %21, %11, %cst_25 {dimension_numbers = #tpu.dot_dimension_numbers<[1], [0], [0], [1], [0, 0, 1, 1], [], []>} : vector<4x4xf32>, vector<4x4xf32>, vector<4x4xf32> -> vector<4x4xf32>
    %23 = arith.subf %11, %22 : vector<4x4xf32>
    %24 = arith.mulf %14, %14 : vector<4x4xf32>
    %25 = arith.mulf %17, %17 : vector<4x4xf32>
    %26 = arith.addf %24, %25 : vector<4x4xf32>
    %27 = arith.mulf %20, %20 : vector<4x4xf32>
    %28 = arith.addf %26, %27 : vector<4x4xf32>
    %29 = arith.mulf %23, %23 : vector<4x4xf32>
    %30 = arith.addf %28, %29 : vector<4x4xf32>
    %c0_26 = arith.constant 0 : index
    %c0_27 = arith.constant 0 : index
    %c0_28 = arith.constant 0 : index
    %31 = vector.load %arg9[%c0_26, %c0_27, %c0_28] : memref<1x4x4xf32, #tpu.memory_space<vmem>>, vector<1x4x4xf32>
    %32 = vector.shape_cast %31 : vector<1x4x4xf32> to vector<4x4xf32>
    %33 = vector.shape_cast %30 : vector<4x4xf32> to vector<1x4x4xf32>
    tpu.vector_store %arg9[%c0_26, %c0_27, %c0_28], %33 {strides = array<i32>} : memref<1x4x4xf32, #tpu.memory_space<vmem>>, vector<1x4x4xf32>,
    return
  }
  func.func @transform_0(%arg0: i32) -> (i32, i32, i32, i32) {
    %c0_i32 = arith.constant 0 : i32
    %c0_i32_0 = arith.constant 0 : i32
    %c0_i32_1 = arith.constant 0 : i32
    %c0_i32_2 = arith.constant 0 : i32
    return %arg0, %c0_i32, %c0_i32_0, %c0_i32_1 : i32, i32, i32, i32
  }
  func.func @transform_1(%arg0: i32) -> (i32, i32, i32, i32) {
    %c0_i32 = arith.constant 0 : i32
    %c0_i32_0 = arith.constant 0 : i32
    %c0_i32_1 = arith.constant 0 : i32
    %c0_i32_2 = arith.constant 0 : i32
    return %arg0, %c0_i32, %c0_i32_0, %c0_i32_1 : i32, i32, i32, i32
  }
  func.func @transform_2(%arg0: i32) -> (i32, i32) {
    %c0_i32 = arith.constant 0 : i32
    %c0_i32_0 = arith.constant 0 : i32
    %c0_i32_1 = arith.constant 0 : i32
    return %c0_i32, %c0_i32_0 : i32, i32
  }
  func.func @transform_3(%arg0: i32) -> (i32, i32) {
    %c0_i32 = arith.constant 0 : i32
    %c0_i32_0 = arith.constant 0 : i32
    %c0_i32_1 = arith.constant 0 : i32
    return %c0_i32, %c0_i32_0 : i32, i32
  }
  func.func @transform_4(%arg0: i32) -> (i32, i32) {
    %c0_i32 = arith.constant 0 : i32
    %c0_i32_0 = arith.constant 0 : i32
    %c0_i32_1 = arith.constant 0 : i32
    return %c0_i32, %c0_i32_0 : i32, i32
  }
  func.func @transform_5(%arg0: i32) -> (i32, i32) {
    %c0_i32 = arith.constant 0 : i32
    %c0_i32_0 = arith.constant 0 : i32
    %c0_i32_1 = arith.constant 0 : i32
    return %c0_i32, %c0_i32_0 : i32, i32
  }
  func.func @transform_6(%arg0: i32) -> (i32, i32) {
    %c0_i32 = arith.constant 0 : i32
    %c0_i32_0 = arith.constant 0 : i32
    %c0_i32_1 = arith.constant 0 : i32
    return %c0_i32, %c0_i32_0 : i32, i32
  }
  func.func @transform_7(%arg0: i32) -> (i32, i32) {
    %c0_i32 = arith.constant 0 : i32
    %c0_i32_0 = arith.constant 0 : i32
    %c0_i32_1 = arith.constant 0 : i32
    return %c0_i32, %c0_i32_0 : i32, i32
  }
  func.func @transform_8(%arg0: i32) -> (i32, i32, i32) {
    %c0_i32 = arith.constant 0 : i32
    %c0_i32_0 = arith.constant 0 : i32
    %c0_i32_1 = arith.constant 0 : i32
    return %arg0, %c0_i32, %c0_i32_0 : i32, i32, i32
  }
}

</mosaic_0001>

<llo_original>
// kernel: tpu_custom_call.1
$region0: #{tpu_custom_call.1}
  #allocation0 [shape = 'u32[]', space=smem, size = 0x4, offset = 0x4, fixed_abs, tag = 'smem constant byte address 0x4 - core index']
  #allocation1 [shape = 'u32[144,128]{1,0:T(1,128)}', space=vmem, size = 0x12000, scoped, tag = 'internal scratch']
  %s0 = inlined_call_operand.hbm [shape: f32[2,4,16,16], index: 0, kind: input, shape index: {}]
  %s1 = inlined_call_operand.hbm [shape: f32[2,4,16,16], index: 1, kind: input, shape index: {}]
  %s2 = inlined_call_operand.vmem [shape: f32[4,16], index: 2, kind: input, shape index: {}]
  %s3 = inlined_call_operand.vmem [shape: f32[16,4], index: 3, kind: input, shape index: {}]
  %s4 = inlined_call_operand.vmem [shape: f32[4,4], index: 4, kind: input, shape index: {}]
  %s5 = inlined_call_operand.vmem [shape: f32[4,4], index: 5, kind: input, shape index: {}]
  %s6 = inlined_call_operand.vmem [shape: f32[4,4], index: 6, kind: input, shape index: {}]
  %s7 = inlined_call_operand.vmem [shape: f32[4,4], index: 7, kind: input, shape index: {}]
  %s8 = inlined_call_operand.hbm [shape: f32[2,4,4], index: 8, kind: output, shape index: {}]
  %s9 = sld [smem:[#allocation0]]
  $region73: #{tpu_custom_call.1} parent=0
    _
  %s11 = ssub.s32 1, %s9
  %s12 = scalar_select 0, %s11, %s9
  $region1: #{tpu_custom_call.1} parent=0
    #allocation2 [shape = 'u8[65536]{0}', space=vmem, size = 0x10000, scoped, tag = 'input window, operand 0']
    #allocation3 [shape = 's32[2]{0}', space=sflag, size = 0x8, scoped, tag = 'scoped memory for tpu_custom_call.1']
    #allocation4 [shape = 's32[2]{0}', space=sflag, size = 0x8, scoped, tag = 'scoped memory for tpu_custom_call.1']
    #allocation5 [shape = 'u8[65536]{0}', space=vmem, size = 0x10000, scoped, tag = 'input window, operand 1']
    #allocation6 [shape = 's32[2]{0}', space=sflag, size = 0x8, scoped, tag = 'scoped memory for tpu_custom_call.1']
    #allocation7 [shape = 'u8[4096]{0}', space=vmem, size = 0x1000, scoped, tag = 'output window, operand 0']
    %13 = vsyncpa [#allocation3], 0
    %s14 = scalar_lea.sflag [#allocation3], 1
    %15 = vsyncpa %s14, 0
    %16 = vsyncpa [#allocation6], 0
    %s17 = scalar_lea.sflag [#allocation6], 1
    %18 = vsyncpa %s17, 0
    %19 = vsyncpa [#allocation4], 0
    %s20 = scalar_lea.sflag [#allocation4], 1
    %21 = vsyncpa %s20, 0
    loop: start=0, step=1, limit=4
    $region2: #{tpu_custom_call.1} parent=1 // loop_pre_header
      _
    $region3: #{tpu_custom_call.1} parent=1 // loop_header
      %s23 = sphi 0, %s27
      %p24 = scmp.ge.s32.totalorder %s23, 4
      %s33 = sphi 0, %s35
      %s36 = sphi 0, %s33
      %s37 = sphi 0, %s36
      %s53 = sphi 0, %s37
      %s59 = sphi 0, %s61
      %s62 = sphi 0, %s59
      %s63 = sphi 0, %s62
      %s79 = sphi 0, %s63
      %s83 = sphi 0, %s83
      %s85 = sphi 0, %s83
      %s86 = sphi 0, %s85
      %s100 = sphi 0, %s86
      %s104 = sphi 0, %s104
      %s106 = sphi 0, %s104
      %s107 = sphi 0, %s106
      %s121 = sphi 0, %s107
      %s125 = sphi 0, %s125
      %s127 = sphi 0, %s125
      %s128 = sphi 0, %s127
      %s142 = sphi 0, %s128
      %s146 = sphi 0, %s146
      %s148 = sphi 0, %s146
      %s149 = sphi 0, %s148
      %s163 = sphi 0, %s149
      %s167 = sphi 0, %s167
      %s169 = sphi 0, %s167
      %s170 = sphi 0, %s169
      %s184 = sphi 0, %s170
      %s188 = sphi 0, %s188
      %s190 = sphi 0, %s188
      %s191 = sphi 0, %s190
      %s205 = sphi 0, %s191
      %s211 = sphi 0, %s213
      %s214 = sphi 0, %s211
      %s215 = sphi 0, %s214
      %s231 = sphi 0, %s215
    $region4: #{tpu_custom_call.1} parent=1 // loop_header_branch
      %26 = sbr.rel (%p24) target = $region8
    $region5: #{tpu_custom_call.1} parent=1 // loop_body
      %s28 = ssub.s32 %s23, 1
      %s29 = ssub.s32 %s23, 2
      %s30 = sadd.s32 %s23, 1
      %s31 = ssub.s32 %s23, %s30
      %p32 = scmp.eq.s32.totalorder %s31, 0
      %s34 = sadd.s32 %s33, 1
      %s35 = scalar_select %p32, %s33, %s34
      %p38 = pneg %p32
      %p39 = scmp.eq.s32.totalorder %s23, 1
      %p40 = por %p38, %p39
      %p41 = scmp.ne.s32.totalorder %s33, %s36
      %p42 = scmp.eq.s32.totalorder %s23, 0
      %p43 = por %p41, %p42
      %p44 = scmp.ne.s32.totalorder %s33, %s36
      %p45 = scmp.eq.s32.totalorder %s28, 1
      %p46 = por %p44, %p45
      %p47 = scmp.ne.s32.totalorder %s36, %s37
      %p48 = scmp.eq.s32.totalorder %s28, 0
      %p49 = por %p47, %p48
      %p50 = scmp.ne.s32.totalorder %s36, %s37
      %p51 = scmp.eq.s32.totalorder %s29, 1
      %p52 = por %p50, %p51
      %p54 = scmp.ne.s32.totalorder %s37, %s53
      %p55 = scmp.eq.s32.totalorder %s29, 0
      %p56 = por %p54, %p55
      %s57 = ssub.s32 %s23, %s30
      %p58 = scmp.eq.s32.totalorder %s57, 0
      %s60 = sadd.s32 %s59, 1
      %s61 = scalar_select %p58, %s59, %s60
      %p64 = pneg %p58
      %p65 = scmp.eq.s32.totalorder %s23, 1
      %p66 = por %p64, %p65
      %p67 = scmp.ne.s32.totalorder %s59, %s62
      %p68 = scmp.eq.s32.totalorder %s23, 0
      %p69 = por %p67, %p68
      %p70 = scmp.ne.s32.totalorder %s59, %s62
      %p71 = scmp.eq.s32.totalorder %s28, 1
      %p72 = por %p70, %p71
      %p73 = scmp.ne.s32.totalorder %s62, %s63
      %p74 = scmp.eq.s32.totalorder %s28, 0
      %p75 = por %p73, %p74
      %p76 = scmp.ne.s32.totalorder %s62, %s63
      %p77 = scmp.eq.s32.totalorder %s29, 1
      %p78 = por %p76, %p77
      %p80 = scmp.ne.s32.totalorder %s63, %s79
      %p81 = scmp.eq.s32.totalorder %s29, 0
      %p82 = por %p80, %p81
      %s84 = sadd.s32 %s83, 1
      %p87 = scmp.eq.s32.totalorder %s23, 1
      %p88 = scmp.ne.s32.totalorder %s83, %s85
      %p89 = scmp.eq.s32.totalorder %s23, 0
      %p90 = por %p88, %p89
      %p91 = scmp.ne.s32.totalorder %s83, %s85
      %p92 = scmp.eq.s32.totalorder %s28, 1
      %p93 = por %p91, %p92
      %p94 = scmp.ne.s32.totalorder %s85, %s86
      %p95 = scmp.eq.s32.totalorder %s28, 0
      %p96 = por %p94, %p95
      %p97 = scmp.ne.s32.totalorder %s85, %s86
      %p98 = scmp.eq.s32.totalorder %s29, 1
      %p99 = por %p97, %p98
      %p101 = scmp.ne.s32.totalorder %s86, %s100
      %p102 = scmp.eq.s32.totalorder %s29, 0
      %p103 = por %p101, %p102
      %s105 = sadd.s32 %s104, 1
      %p108 = scmp.eq.s32.totalorder %s23, 1
      %p109 = scmp.ne.s32.totalorder %s104, %s106
      %p110 = scmp.eq.s32.totalorder %s23, 0
      %p111 = por %p109, %p110
      %p112 = scmp.ne.s32.totalorder %s104, %s106
      %p113 = scmp.eq.s32.totalorder %s28, 1
      %p114 = por %p112, %p113
      %p115 = scmp.ne.s32.totalorder %s106, %s107
      %p116 = scmp.eq.s32.totalorder %s28, 0
      %p117 = por %p115, %p116
      %p118 = scmp.ne.s32.totalorder %s106, %s107
      %p119 = scmp.eq.s32.totalorder %s29, 1
      %p120 = por %p118, %p119
      %p122 = scmp.ne.s32.totalorder %s107, %s121
      %p123 = scmp.eq.s32.totalorder %s29, 0
      %p124 = por %p122, %p123
      %s126 = sadd.s32 %s125, 1
      %p129 = scmp.eq.s32.totalorder %s23, 1
      %p130 = scmp.ne.s32.totalorder %s125, %s127
      %p131 = scmp.eq.s32.totalorder %s23, 0
      %p132 = por %p130, %p131
      %p133 = scmp.ne.s32.totalorder %s125, %s127
      %p134 = scmp.eq.s32.totalorder %s28, 1
      %p135 = por %p133, %p134
      %p136 = scmp.ne.s32.totalorder %s127, %s128
      %p137 = scmp.eq.s32.totalorder %s28, 0
      %p138 = por %p136, %p137
      %p139 = scmp.ne.s32.totalorder %s127, %s128
      %p140 = scmp.eq.s32.totalorder %s29, 1
      %p141 = por %p139, %p140
      %p143 = scmp.ne.s32.totalorder %s128, %s142
      %p144 = scmp.eq.s32.totalorder %s29, 0
      %p145 = por %p143, %p144
      %s147 = sadd.s32 %s146, 1
      %p150 = scmp.eq.s32.totalorder %s23, 1
      %p151 = scmp.ne.s32.totalorder %s146, %s148
      %p152 = scmp.eq.s32.totalorder %s23, 0
      %p153 = por %p151, %p152
      %p154 = scmp.ne.s32.totalorder %s146, %s148
      %p155 = scmp.eq.s32.totalorder %s28, 1
      %p156 = por %p154, %p155
      %p157 = scmp.ne.s32.totalorder %s148, %s149
      %p158 = scmp.eq.s32.totalorder %s28, 0
      %p159 = por %p157, %p158
      %p160 = scmp.ne.s32.totalorder %s148, %s149
      %p161 = scmp.eq.s32.totalorder %s29, 1
      %p162 = por %p160, %p161
      %p164 = scmp.ne.s32.totalorder %s149, %s163
      %p165 = scmp.eq.s32.totalorder %s29, 0
      %p166 = por %p164, %p165
      %s168 = sadd.s32 %s167, 1
      %p171 = scmp.eq.s32.totalorder %s23, 1
      %p172 = scmp.ne.s32.totalorder %s167, %s169
      %p173 = scmp.eq.s32.totalorder %s23, 0
      %p174 = por %p172, %p173
      %p175 = scmp.ne.s32.totalorder %s167, %s169
      %p176 = scmp.eq.s32.totalorder %s28, 1
      %p177 = por %p175, %p176
      %p178 = scmp.ne.s32.totalorder %s169, %s170
      %p179 = scmp.eq.s32.totalorder %s28, 0
      %p180 = por %p178, %p179
      %p181 = scmp.ne.s32.totalorder %s169, %s170
      %p182 = scmp.eq.s32.totalorder %s29, 1
      %p183 = por %p181, %p182
      %p185 = scmp.ne.s32.totalorder %s170, %s184
      %p186 = scmp.eq.s32.totalorder %s29, 0
      %p187 = por %p185, %p186
      %s189 = sadd.s32 %s188, 1
      %p192 = scmp.eq.s32.totalorder %s23, 1
      %p193 = scmp.ne.s32.totalorder %s188, %s190
      %p194 = scmp.eq.s32.totalorder %s23, 0
      %p195 = por %p193, %p194
      %p196 = scmp.ne.s32.totalorder %s188, %s190
      %p197 = scmp.eq.s32.totalorder %s28, 1
      %p198 = por %p196, %p197
      %p199 = scmp.ne.s32.totalorder %s190, %s191
      %p200 = scmp.eq.s32.totalorder %s28, 0
      %p201 = por %p199, %p200
      %p202 = scmp.ne.s32.totalorder %s190, %s191
      %p203 = scmp.eq.s32.totalorder %s29, 1
      %p204 = por %p202, %p203
      %p206 = scmp.ne.s32.totalorder %s191, %s205
      %p207 = scmp.eq.s32.totalorder %s29, 0
      %p208 = por %p206, %p207
      %s209 = ssub.s32 %s23, %s30
      %p210 = scmp.eq.s32.totalorder %s209, 0
      %s212 = sadd.s32 %s211, 1
      %s213 = scalar_select %p210, %s211, %s212
      %p216 = pneg %p210
      %p217 = scmp.eq.s32.totalorder %s23, 1
      %p218 = por %p216, %p217
      %p219 = scmp.ne.s32.totalorder %s211, %s214
      %p220 = scmp.eq.s32.totalorder %s23, 0
      %p221 = por %p219, %p220
      %p222 = scmp.ne.s32.totalorder %s211, %s214
      %p223 = scmp.eq.s32.totalorder %s28, 1
      %p224 = por %p222, %p223
      %p225 = scmp.ne.s32.totalorder %s214, %s215
      %p226 = scmp.eq.s32.totalorder %s28, 0
      %p227 = por %p225, %p226
      %p228 = scmp.ne.s32.totalorder %s214, %s215
      %p229 = scmp.eq.s32.totalorder %s29, 1
      %p230 = por %p228, %p229
      %p232 = scmp.ne.s32.totalorder %s215, %s231
      %p233 = scmp.eq.s32.totalorder %s29, 0
      %p234 = por %p232, %p233
      %p235 = scmp.le.s32.totalorder 1, %s23
      %p236 = scmp.lt.s32.totalorder %s23, 3
      %p237 = pnand %p235, %p236
      %p238 = pneg %p237
      // Predicated region
      $region9: #{tpu_custom_call.1} parent=5 // pred_check
        _
      $region10: #{tpu_custom_call.1} parent=5 // pred_check_branch
        %240 = sbr.rel (%p237) target = $region12
      $region11: #{tpu_custom_call.1} parent=5 // pred_region
        %s241 = ssub.s32 %s23, 1
        // Predicated region
        $region13: #{tpu_custom_call.1} parent=11 // pred_check
          %p242 = pneg %p96
        $region14: #{tpu_custom_call.1} parent=11 // pred_check_branch
          %244 = sbr.rel (%p242) target = $region16
        $region15: #{tpu_custom_call.1} parent=11 // pred_region
          _
        $region16: #{tpu_custom_call.1} parent=11 // pred_fallthru
          _
        // Predicated region
        $region17: #{tpu_custom_call.1} parent=11 // pred_check
          %p245 = pneg %p117
        $region18: #{tpu_custom_call.1} parent=11 // pred_check_branch
          %247 = sbr.rel (%p245) target = $region20
        $region19: #{tpu_custom_call.1} parent=11 // pred_region
          _
        $region20: #{tpu_custom_call.1} parent=11 // pred_fallthru
          _
        // Predicated region
        $region21: #{tpu_custom_call.1} parent=11 // pred_check
          %p248 = pneg %p138
        $region22: #{tpu_custom_call.1} parent=11 // pred_check_branch
          %250 = sbr.rel (%p248) target = $region24
        $region23: #{tpu_custom_call.1} parent=11 // pred_region
          _
        $region24: #{tpu_custom_call.1} parent=11 // pred_fallthru
          _
        // Predicated region
        $region25: #{tpu_custom_call.1} parent=11 // pred_check
          %p251 = pneg %p159
        $region26: #{tpu_custom_call.1} parent=11 // pred_check_branch
          %253 = sbr.rel (%p251) target = $region28
        $region27: #{tpu_custom_call.1} parent=11 // pred_region
          _
        $region28: #{tpu_custom_call.1} parent=11 // pred_fallthru
          _
        // Predicated region
        $region29: #{tpu_custom_call.1} parent=11 // pred_check
          %p254 = pneg %p180
        $region30: #{tpu_custom_call.1} parent=11 // pred_check_branch
          %256 = sbr.rel (%p254) target = $region32
        $region31: #{tpu_custom_call.1} parent=11 // pred_region
          _
        $region32: #{tpu_custom_call.1} parent=11 // pred_fallthru
          _
        // Predicated region
        $region33: #{tpu_custom_call.1} parent=11 // pred_check
          %p257 = pneg %p201
        $region34: #{tpu_custom_call.1} parent=11 // pred_check_branch
          %259 = sbr.rel (%p257) target = $region36
        $region35: #{tpu_custom_call.1} parent=11 // pred_region
          _
        $region36: #{tpu_custom_call.1} parent=11 // pred_fallthru
          _
      $region12: #{tpu_custom_call.1} parent=5 // pred_fallthru
        _
      %p260 = scmp.lt.s32.totalorder %s23, 2
      // Predicated region
      $region37: #{tpu_custom_call.1} parent=5 // pred_check
        %p261 = pneg %p260
      $region38: #{tpu_custom_call.1} parent=5 // pred_check_branch
        %263 = sbr.rel (%p261) target = $region40
      $region39: #{tpu_custom_call.1} parent=5 // pred_region
        // Predicated region
        $region41: #{tpu_custom_call.1} parent=39 // pred_check
          %p264 = pneg %p43
        $region42: #{tpu_custom_call.1} parent=39 // pred_check_branch
          %266 = sbr.rel (%p264) target = $region44
        $region43: #{tpu_custom_call.1} parent=39 // pred_region
          %s267 = sand.u32 %s33, 1
          %s268 = scalar_lea.sflag [#allocation3], %s267
          %s269 = sand.u32 %s33, 1
          %s270 = smul.addr %s269, 64
          %s271 = scalar_lea.vmem [#allocation2], %s270
          %s273 = ssub.s32 1024, 1024
          %274 = vsyncadd %s268, %s273
          %s275 = smul.addr %s23, 8
          %s276 = smul.addr %s275, 128
          %s277 = scalar_lea.hbm %s0, %s276
          %s278 = sshll.u32 %s271, 4
          %s279 = int_to_ptr.vmem [resolvable:$true] %s278
          %284 = dma.hbm_to_vmem [thread:$0]  %s277, 1024, %s279, %s268, 128, 128, 8
        $region44: #{tpu_custom_call.1} parent=39 // pred_fallthru
          _
        // Predicated region
        $region45: #{tpu_custom_call.1} parent=39 // pred_check
          %p285 = pneg %p69
        $region46: #{tpu_custom_call.1} parent=39 // pred_check_branch
          %287 = sbr.rel (%p285) target = $region48
        $region47: #{tpu_custom_call.1} parent=39 // pred_region
          %s288 = sand.u32 %s59, 1
          %s289 = scalar_lea.sflag [#allocation6], %s288
          %s290 = sand.u32 %s59, 1
          %s291 = smul.addr %s290, 64
          %s292 = scalar_lea.vmem [#allocation5], %s291
          %s294 = ssub.s32 1024, 1024
          %295 = vsyncadd %s289, %s294
          %s296 = smul.addr %s23, 8
          %s297 = smul.addr %s296, 128
          %s298 = scalar_lea.hbm %s1, %s297
          %s299 = sshll.u32 %s292, 4
          %s300 = int_to_ptr.vmem [resolvable:$true] %s299
          %305 = dma.hbm_to_vmem [thread:$0]  %s298, 1024, %s300, %s289, 128, 128, 8
        $region48: #{tpu_custom_call.1} parent=39 // pred_fallthru
          _
      $region40: #{tpu_custom_call.1} parent=5 // pred_fallthru
        _
      %p306 = scmp.le.s32.totalorder 1, %s23
      %p307 = scmp.lt.s32.totalorder %s23, 3
      %p308 = pnand %p306, %p307
      %p309 = pneg %p308
      // Predicated region
      $region49: #{tpu_custom_call.1} parent=5 // pred_check
        _
      $region50: #{tpu_custom_call.1} parent=5 // pred_check_branch
        %311 = sbr.rel (%p308) target = $region52
      $region51: #{tpu_custom_call.1} parent=5 // pred_region
        %s312 = ssub.s32 %s23, 1
        %s313 = sand.u32 %s36, 1
        %s314 = scalar_lea.sflag [#allocation3], %s313
        %s315 = sand.u32 %s36, 1
        %s316 = smul.addr %s315, 64
        %s317 = scalar_lea.vmem [#allocation2], %s316
        // Predicated region
        $region53: #{tpu_custom_call.1} parent=51 // pred_check
          %p318 = pneg %p49
        $region54: #{tpu_custom_call.1} parent=51 // pred_check_branch
          %320 = sbr.rel (%p318) target = $region56
        $region55: #{tpu_custom_call.1} parent=51 // pred_region
          %321 = dma.done %s314, 1024
        $region56: #{tpu_custom_call.1} parent=51 // pred_fallthru
          _
        %s322 = sand.u32 %s62, 1
        %s323 = scalar_lea.sflag [#allocation6], %s322
        %s324 = sand.u32 %s62, 1
        %s325 = smul.addr %s324, 64
        %s326 = scalar_lea.vmem [#allocation5], %s325
        // Predicated region
        $region57: #{tpu_custom_call.1} parent=51 // pred_check
          %p327 = pneg %p75
        $region58: #{tpu_custom_call.1} parent=51 // pred_check_branch
          %329 = sbr.rel (%p327) target = $region60
        $region59: #{tpu_custom_call.1} parent=51 // pred_region
          %330 = dma.done %s323, 1024
        $region60: #{tpu_custom_call.1} parent=51 // pred_fallthru
          _
        %s331 = sand.u32 %s36, 1
        %s332 = scalar_lea.sflag [#allocation3], %s331
        %s333 = sand.u32 %s36, 1
        %s334 = smul.addr %s333, 64
        %s335 = scalar_lea.vmem [#allocation2], %s334
        %p336 = pneg %p49
        %p337 = pneg %p46
        %s338 = sand.u32 %s62, 1
        %s339 = scalar_lea.sflag [#allocation6], %s338
        %s340 = sand.u32 %s62, 1
        %s341 = smul.addr %s340, 64
        %s342 = scalar_lea.vmem [#allocation5], %s341
        %p343 = pneg %p75
        %p344 = pneg %p72
        %p345 = pneg %p96
        %p346 = pneg %p93
        %p347 = pneg %p117
        %p348 = pneg %p114
        %p349 = pneg %p138
        %p350 = pneg %p135
        %p351 = pneg %p159
        %p352 = pneg %p156
        %p353 = pneg %p180
        %p354 = pneg %p177
        %p355 = pneg %p201
        %p356 = pneg %p198
        %p357 = pneg %p227
        %p358 = pneg %p224
        %s359 = sand.u32 %s214, 1
        %s360 = scalar_lea.sflag [#allocation4], %s359
        %s361 = sand.u32 %s214, 1
        %s362 = smul.addr %s361, 4
        %s363 = scalar_lea.vmem [#allocation7], %s362
        %v364 = vld [vmem:[%s317] sm:$0xff]
        %v365 = vld [vmem:[%s317 + $0x8] sm:$0xff]
        %v366 = vld [vmem:[%s317 + $0x10] sm:$0xff]
        %v367 = vld [vmem:[%s317 + $0x18] sm:$0xff]
        %v368 = vld [vmem:[%s317 + $0x20] sm:$0xff]
        %v369 = vld [vmem:[%s317 + $0x28] sm:$0xff]
        %v370 = vld [vmem:[%s317 + $0x30] sm:$0xff]
        %v371 = vld [vmem:[%s317 + $0x38] sm:$0xff]
        %v372 = vld [vmem:[%s326] sm:$0xff]
        %v373 = vld [vmem:[%s326 + $0x8] sm:$0xff]
        %v374 = vld [vmem:[%s326 + $0x10] sm:$0xff]
        %v375 = vld [vmem:[%s326 + $0x18] sm:$0xff]
        %v376 = vld [vmem:[%s326 + $0x20] sm:$0xff]
        %v377 = vld [vmem:[%s326 + $0x28] sm:$0xff]
        %v378 = vld [vmem:[%s326 + $0x30] sm:$0xff]
        %v379 = vld [vmem:[%s326 + $0x38] sm:$0xff]
        %v380 = vsub.f32 %v364, %v372
        %v381 = vsub.f32 %v365, %v373
        %v382 = vsub.f32 %v366, %v374
        %v383 = vsub.f32 %v367, %v375
        %v384 = vsub.f32 %v368, %v376
        %v385 = vsub.f32 %v369, %v377
        %v386 = vsub.f32 %v370, %v378
        %v387 = vsub.f32 %v371, %v379
        %vm388 = vcmask 130048
        %v389 = vsel %vm388, %v380, 0.0
        %v390 = vsel %vm388, %v382, 0.0
        %v391 = vadd.f32 %v389, %v390
        %v392 = vsel %vm388, %v384, 0.0
        %v393 = vadd.f32 %v391, %v392
        %v394 = vsel %vm388, %v386, 0.0
        %v395 = vadd.f32 %v393, %v394
        %v396 = vsel %vm388, %v381, 0.0
        %v397 = vsel %vm388, %v383, 0.0
        %v398 = vadd.f32 %v396, %v397
        %v399 = vsel %vm388, %v385, 0.0
        %v400 = vadd.f32 %v398, %v399
        %v401 = vsel %vm388, %v387, 0.0
        %v402 = vadd.f32 %v400, %v401
        %v403 = vrcp.pop 4.0
        %v404 = vmul.f32 %v395, %v403
        %v405 = vmul.f32 %v402, %v403
        %v406 = vld [vmem:[%s2] sm:$0xf]
        %v408 = vsel %vm388, %v406, 0
        %410 = vmatprep.subr.mxu0 0.0
        %411 = vmatpush1.msra.mxu0 %v404
        %412 = vmatprep.subr.mxu0 0.0
        %413 = vmatpush1.msra.mxu0 %v405
        %414 = vmatprep.subr.mxu0 0.0
        %415 = vmatpush1.msra.mxu0 0.0
        %416 = vmatprep.subr.mxu0 0.0
        %417 = vmatpush1.msra.mxu0 0.0
        %418 = vmatprep.subr.mxu0 0.0
        %419 = vmatpush1.msra.mxu0 0.0
        %420 = vmatprep.subr.mxu0 0.0
        %421 = vmatpush1.msra.mxu0 0.0
        %422 = vmatprep.subr.mxu0 0.0
        %423 = vmatpush1.msra.mxu0 0.0
        %424 = vmatprep.subr.mxu0 0.0
        %425 = vmatpush1.msra.mxu0 0.0
        %426 = vmatprep.subr.mxu0 0.0
        %427 = vmatpush1.msra.mxu0 0.0
        %428 = vmatprep.subr.mxu0 0.0
        %429 = vmatpush1.msra.mxu0 0.0
        %430 = vmatprep.subr.mxu0 0.0
        %431 = vmatpush1.msra.mxu0 0.0
        %432 = vmatprep.subr.mxu0 0.0
        %433 = vmatpush1.msra.mxu0 0.0
        %434 = vmatprep.subr.mxu0 0.0
        %435 = vmatpush1.msra.mxu0 0.0
        %436 = vmatprep.subr.mxu0 0.0
        %437 = vmatpush1.msra.mxu0 0.0
        %438 = vmatprep.subr.mxu0 0.0
        %439 = vmatpush1.msra.mxu0 0.0
        %440 = vmatprep.subr.mxu0 0.0
        %441 = vmatpush1.msra.mxu0 0.0
        %442 = vmatprep.subr.mxu0 0.0
        %443 = vmatpush1.msra.mxu0 0.0
        %444 = vmatprep.subr.mxu0 0.0
        %445 = vmatpush1.msra.mxu0 0.0
        %446 = vmatprep.subr.mxu0 0.0
        %447 = vmatpush1.msra.mxu0 0.0
        %448 = vmatprep.subr.mxu0 0.0
        %449 = vmatpush1.msra.mxu0 0.0
        %450 = vmatprep.subr.mxu0 0.0
        %451 = vmatpush1.msra.mxu0 0.0
        %452 = vmatprep.subr.mxu0 0.0
        %453 = vmatpush1.msra.mxu0 0.0
        %454 = vmatprep.subr.mxu0 0.0
        %455 = vmatpush1.msra.mxu0 0.0
        %456 = vmatprep.subr.mxu0 0.0
        %457 = vmatpush1.msra.mxu0 0.0
        %458 = vmatprep.subr.mxu0 0.0
        %459 = vmatpush1.msra.mxu0 0.0
        %460 = vmatprep.subr.mxu0 0.0
        %461 = vmatpush1.msra.mxu0 0.0
        %462 = vmatprep.subr.mxu0 0.0
        %463 = vmatpush1.msra.mxu0 0.0
        %464 = vmatprep.subr.mxu0 0.0
        %465 = vmatpush1.msra.mxu0 0.0
        %466 = vmatprep.subr.mxu0 0.0
        %467 = vmatpush1.msra.mxu0 0.0
        %468 = vmatprep.subr.mxu0 0.0
        %469 = vmatpush1.msra.mxu0 0.0
        %470 = vmatprep.subr.mxu0 0.0
        %471 = vmatpush1.msra.mxu0 0.0
        %472 = vmatprep.subr.mxu0 0.0
        %473 = vmatpush1.msra.mxu0 0.0
        %474 = vmatprep.mubr.f32.mxu0 0.0
        %475 = vmatmul.mubr.f32.gmra.mrb[0].mxu0 %v408
        %v476 = vpop.f32.mrb[0].mxu0
        %v477 = vadd.f32 0.0, %v476
        %v478 = vpop.f32.mrb[0].mxu0
        %479 = vdwg.mxu0
        %v480 = vld [vmem:[%s3] sm:$0xff]
        %v481 = vld [vmem:[%s3 + $0x8] sm:$0xff]
        %v483 = vsel %vm388, %v477, 0
        %485 = vmatprep.subr.mxu0 0.0
        %486 = vmatpush1.msra.mxu0 %v480
        %487 = vmatprep.subr.mxu0 0.0
        %488 = vmatpush1.msra.mxu0 %v481
        %489 = vmatprep.subr.mxu0 0.0
        %490 = vmatpush1.msra.mxu0 0.0
        %491 = vmatprep.subr.mxu0 0.0
        %492 = vmatpush1.msra.mxu0 0.0
        %493 = vmatprep.subr.mxu0 0.0
        %494 = vmatpush1.msra.mxu0 0.0
        %495 = vmatprep.subr.mxu0 0.0
        %496 = vmatpush1.msra.mxu0 0.0
        %497 = vmatprep.subr.mxu0 0.0
        %498 = vmatpush1.msra.mxu0 0.0
        %499 = vmatprep.subr.mxu0 0.0
        %500 = vmatpush1.msra.mxu0 0.0
        %501 = vmatprep.subr.mxu0 0.0
        %502 = vmatpush1.msra.mxu0 0.0
        %503 = vmatprep.subr.mxu0 0.0
        %504 = vmatpush1.msra.mxu0 0.0
        %505 = vmatprep.subr.mxu0 0.0
        %506 = vmatpush1.msra.mxu0 0.0
        %507 = vmatprep.subr.mxu0 0.0
        %508 = vmatpush1.msra.mxu0 0.0
        %509 = vmatprep.subr.mxu0 0.0
        %510 = vmatpush1.msra.mxu0 0.0
        %511 = vmatprep.subr.mxu0 0.0
        %512 = vmatpush1.msra.mxu0 0.0
        %513 = vmatprep.subr.mxu0 0.0
        %514 = vmatpush1.msra.mxu0 0.0
        %515 = vmatprep.subr.mxu0 0.0
        %516 = vmatpush1.msra.mxu0 0.0
        %517 = vmatprep.subr.mxu0 0.0
        %518 = vmatpush1.msra.mxu0 0.0
        %519 = vmatprep.subr.mxu0 0.0
        %520 = vmatpush1.msra.mxu0 0.0
        %521 = vmatprep.subr.mxu0 0.0
        %522 = vmatpush1.msra.mxu0 0.0
        %523 = vmatprep.subr.mxu0 0.0
        %524 = vmatpush1.msra.mxu0 0.0
        %525 = vmatprep.subr.mxu0 0.0
        %526 = vmatpush1.msra.mxu0 0.0
        %527 = vmatprep.subr.mxu0 0.0
        %528 = vmatpush1.msra.mxu0 0.0
        %529 = vmatprep.subr.mxu0 0.0
        %530 = vmatpush1.msra.mxu0 0.0
        %531 = vmatprep.subr.mxu0 0.0
        %532 = vmatpush1.msra.mxu0 0.0
        %533 = vmatprep.subr.mxu0 0.0
        %534 = vmatpush1.msra.mxu0 0.0
        %535 = vmatprep.subr.mxu0 0.0
        %536 = vmatpush1.msra.mxu0 0.0
        %537 = vmatprep.subr.mxu0 0.0
        %538 = vmatpush1.msra.mxu0 0.0
        %539 = vmatprep.subr.mxu0 0.0
        %540 = vmatpush1.msra.mxu0 0.0
        %541 = vmatprep.subr.mxu0 0.0
        %542 = vmatpush1.msra.mxu0 0.0
        %543 = vmatprep.subr.mxu0 0.0
        %544 = vmatpush1.msra.mxu0 0.0
        %545 = vmatprep.subr.mxu0 0.0
        %546 = vmatpush1.msra.mxu0 0.0
        %547 = vmatprep.subr.mxu0 0.0
        %548 = vmatpush1.msra.mxu0 0.0
        %549 = vmatprep.mubr.f32.mxu0 0.0
        %550 = vmatmul.mubr.f32.gmra.mrb[0].mxu0 %v483
        %v551 = vpop.f32.mrb[0].mxu0
        %v552 = vadd.f32 0.0, %v551
        %v553 = vpop.f32.mrb[0].mxu0
        %554 = vdwg.mxu0
        %v555 = vld [vmem:[%s4] sm:$0xf]
        %vm556 = vcmask 31744
        %v558 = vsel %vm556, %v552, 0
        %vm560 = vcmask 1043456
        %v562 = vsel %vm560, %v555, 0
        %564 = vmatprep.subr.mxu0 0.0
        %565 = vmatpush1.msra.mxu0 %v562
        %566 = vmatprep.subr.mxu0 0.0
        %567 = vmatpush1.msra.mxu0 0.0
        %568 = vmatprep.subr.mxu0 0.0
        %569 = vmatpush1.msra.mxu0 0.0
        %570 = vmatprep.subr.mxu0 0.0
        %571 = vmatpush1.msra.mxu0 0.0
        %572 = vmatprep.subr.mxu0 0.0
        %573 = vmatpush1.msra.mxu0 0.0
        %574 = vmatprep.subr.mxu0 0.0
        %575 = vmatpush1.msra.mxu0 0.0
        %576 = vmatprep.subr.mxu0 0.0
        %577 = vmatpush1.msra.mxu0 0.0
        %578 = vmatprep.subr.mxu0 0.0
        %579 = vmatpush1.msra.mxu0 0.0
        %580 = vmatprep.subr.mxu0 0.0
        %581 = vmatpush1.msra.mxu0 0.0
        %582 = vmatprep.subr.mxu0 0.0
        %583 = vmatpush1.msra.mxu0 0.0
        %584 = vmatprep.subr.mxu0 0.0
        %585 = vmatpush1.msra.mxu0 0.0
        %586 = vmatprep.subr.mxu0 0.0
        %587 = vmatpush1.msra.mxu0 0.0
        %588 = vmatprep.subr.mxu0 0.0
        %589 = vmatpush1.msra.mxu0 0.0
        %590 = vmatprep.subr.mxu0 0.0
        %591 = vmatpush1.msra.mxu0 0.0
        %592 = vmatprep.subr.mxu0 0.0
        %593 = vmatpush1.msra.mxu0 0.0
        %594 = vmatprep.subr.mxu0 0.0
        %595 = vmatpush1.msra.mxu0 0.0
        %596 = vmatprep.subr.mxu0 0.0
        %597 = vmatpush1.msra.mxu0 0.0
        %598 = vmatprep.subr.mxu0 0.0
        %599 = vmatpush1.msra.mxu0 0.0
        %600 = vmatprep.subr.mxu0 0.0
        %601 = vmatpush1.msra.mxu0 0.0
        %602 = vmatprep.subr.mxu0 0.0
        %603 = vmatpush1.msra.mxu0 0.0
        %604 = vmatprep.subr.mxu0 0.0
        %605 = vmatpush1.msra.mxu0 0.0
        %606 = vmatprep.subr.mxu0 0.0
        %607 = vmatpush1.msra.mxu0 0.0
        %608 = vmatprep.subr.mxu0 0.0
        %609 = vmatpush1.msra.mxu0 0.0
        %610 = vmatprep.subr.mxu0 0.0
        %611 = vmatpush1.msra.mxu0 0.0
        %612 = vmatprep.subr.mxu0 0.0
        %613 = vmatpush1.msra.mxu0 0.0
        %614 = vmatprep.subr.mxu0 0.0
        %615 = vmatpush1.msra.mxu0 0.0
        %616 = vmatprep.subr.mxu0 0.0
        %617 = vmatpush1.msra.mxu0 0.0
        %618 = vmatprep.subr.mxu0 0.0
        %619 = vmatpush1.msra.mxu0 0.0
        %620 = vmatprep.subr.mxu0 0.0
        %621 = vmatpush1.msra.mxu0 0.0
        %622 = vmatprep.subr.mxu0 0.0
        %623 = vmatpush1.msra.mxu0 0.0
        %624 = vmatprep.subr.mxu0 0.0
        %625 = vmatpush1.msra.mxu0 0.0
        %626 = vmatprep.subr.mxu0 0.0
        %627 = vmatpush1.msra.mxu0 0.0
        %628 = vmatprep.mubr.f32.mxu0 0.0
        %629 = vmatmul.mubr.f32.gmra.mrb[0].mxu0 %v558
        %v630 = vpop.f32.mrb[0].mxu0
        %v631 = vadd.f32 0.0, %v630
        %v632 = vpop.f32.mrb[0].mxu0
        %633 = vdwg.mxu0
        %v634 = vsub.f32 %v552, %v631
        %v635 = vld [vmem:[%s5] sm:$0xf]
        %v637 = vsel %vm560, %v635, 0
        %639 = vmatprep.subr.mxu0 0.0
        %640 = vmatpush1.msra.mxu0 %v637
        %641 = vmatprep.subr.mxu0 0.0
        %642 = vmatpush1.msra.mxu0 0.0
        %643 = vmatprep.subr.mxu0 0.0
        %644 = vmatpush1.msra.mxu0 0.0
        %645 = vmatprep.subr.mxu0 0.0
        %646 = vmatpush1.msra.mxu0 0.0
        %647 = vmatprep.subr.mxu0 0.0
        %648 = vmatpush1.msra.mxu0 0.0
        %649 = vmatprep.subr.mxu0 0.0
        %650 = vmatpush1.msra.mxu0 0.0
        %651 = vmatprep.subr.mxu0 0.0
        %652 = vmatpush1.msra.mxu0 0.0
        %653 = vmatprep.subr.mxu0 0.0
        %654 = vmatpush1.msra.mxu0 0.0
        %655 = vmatprep.subr.mxu0 0.0
        %656 = vmatpush1.msra.mxu0 0.0
        %657 = vmatprep.subr.mxu0 0.0
        %658 = vmatpush1.msra.mxu0 0.0
        %659 = vmatprep.subr.mxu0 0.0
        %660 = vmatpush1.msra.mxu0 0.0
        %661 = vmatprep.subr.mxu0 0.0
        %662 = vmatpush1.msra.mxu0 0.0
        %663 = vmatprep.subr.mxu0 0.0
        %664 = vmatpush1.msra.mxu0 0.0
        %665 = vmatprep.subr.mxu0 0.0
        %666 = vmatpush1.msra.mxu0 0.0
        %667 = vmatprep.subr.mxu0 0.0
        %668 = vmatpush1.msra.mxu0 0.0
        %669 = vmatprep.subr.mxu0 0.0
        %670 = vmatpush1.msra.mxu0 0.0
        %671 = vmatprep.subr.mxu0 0.0
        %672 = vmatpush1.msra.mxu0 0.0
        %673 = vmatprep.subr.mxu0 0.0
        %674 = vmatpush1.msra.mxu0 0.0
        %675 = vmatprep.subr.mxu0 0.0
        %676 = vmatpush1.msra.mxu0 0.0
        %677 = vmatprep.subr.mxu0 0.0
        %678 = vmatpush1.msra.mxu0 0.0
        %679 = vmatprep.subr.mxu0 0.0
        %680 = vmatpush1.msra.mxu0 0.0
        %681 = vmatprep.subr.mxu0 0.0
        %682 = vmatpush1.msra.mxu0 0.0
        %683 = vmatprep.subr.mxu0 0.0
        %684 = vmatpush1.msra.mxu0 0.0
        %685 = vmatprep.subr.mxu0 0.0
        %686 = vmatpush1.msra.mxu0 0.0
        %687 = vmatprep.subr.mxu0 0.0
        %688 = vmatpush1.msra.mxu0 0.0
        %689 = vmatprep.subr.mxu0 0.0
        %690 = vmatpush1.msra.mxu0 0.0
        %691 = vmatprep.subr.mxu0 0.0
        %692 = vmatpush1.msra.mxu0 0.0
        %693 = vmatprep.subr.mxu0 0.0
        %694 = vmatpush1.msra.mxu0 0.0
        %695 = vmatprep.subr.mxu0 0.0
        %696 = vmatpush1.msra.mxu0 0.0
        %697 = vmatprep.subr.mxu0 0.0
        %698 = vmatpush1.msra.mxu0 0.0
        %699 = vmatprep.subr.mxu0 0.0
        %700 = vmatpush1.msra.mxu0 0.0
        %701 = vmatprep.subr.mxu0 0.0
        %702 = vmatpush1.msra.mxu0 0.0
        %703 = vmatprep.mubr.f32.mxu0 0.0
        %704 = vmatmul.mubr.f32.gmra.mrb[0].mxu0 %v558
        %v705 = vpop.f32.mrb[0].mxu0
        %v706 = vadd.f32 0.0, %v705
        %v707 = vpop.f32.mrb[0].mxu0
        %708 = vdwg.mxu0
        %v709 = vsub.f32 %v552, %v706
        %v710 = vld [vmem:[%s6] sm:$0xf]
        %v712 = vsel %vm556, %v710, 0
        %v714 = vsel %vm560, %v552, 0
        %716 = vmatprep.subr.mxu0 0.0
        %717 = vmatpush1.msra.mxu0 %v714
        %718 = vmatprep.subr.mxu0 0.0
        %719 = vmatpush1.msra.mxu0 0.0
        %720 = vmatprep.subr.mxu0 0.0
        %721 = vmatpush1.msra.mxu0 0.0
        %722 = vmatprep.subr.mxu0 0.0
        %723 = vmatpush1.msra.mxu0 0.0
        %724 = vmatprep.subr.mxu0 0.0
        %725 = vmatpush1.msra.mxu0 0.0
        %726 = vmatprep.subr.mxu0 0.0
        %727 = vmatpush1.msra.mxu0 0.0
        %728 = vmatprep.subr.mxu0 0.0
        %729 = vmatpush1.msra.mxu0 0.0
        %730 = vmatprep.subr.mxu0 0.0
        %731 = vmatpush1.msra.mxu0 0.0
        %732 = vmatprep.subr.mxu0 0.0
        %733 = vmatpush1.msra.mxu0 0.0
        %734 = vmatprep.subr.mxu0 0.0
        %735 = vmatpush1.msra.mxu0 0.0
        %736 = vmatprep.subr.mxu0 0.0
        %737 = vmatpush1.msra.mxu0 0.0
        %738 = vmatprep.subr.mxu0 0.0
        %739 = vmatpush1.msra.mxu0 0.0
        %740 = vmatprep.subr.mxu0 0.0
        %741 = vmatpush1.msra.mxu0 0.0
        %742 = vmatprep.subr.mxu0 0.0
        %743 = vmatpush1.msra.mxu0 0.0
        %744 = vmatprep.subr.mxu0 0.0
        %745 = vmatpush1.msra.mxu0 0.0
        %746 = vmatprep.subr.mxu0 0.0
        %747 = vmatpush1.msra.mxu0 0.0
        %748 = vmatprep.subr.mxu0 0.0
        %749 = vmatpush1.msra.mxu0 0.0
        %750 = vmatprep.subr.mxu0 0.0
        %751 = vmatpush1.msra.mxu0 0.0
        %752 = vmatprep.subr.mxu0 0.0
        %753 = vmatpush1.msra.mxu0 0.0
        %754 = vmatprep.subr.mxu0 0.0
        %755 = vmatpush1.msra.mxu0 0.0
        %756 = vmatprep.subr.mxu0 0.0
        %757 = vmatpush1.msra.mxu0 0.0
        %758 = vmatprep.subr.mxu0 0.0
        %759 = vmatpush1.msra.mxu0 0.0
        %760 = vmatprep.subr.mxu0 0.0
        %761 = vmatpush1.msra.mxu0 0.0
        %762 = vmatprep.subr.mxu0 0.0
        %763 = vmatpush1.msra.mxu0 0.0
        %764 = vmatprep.subr.mxu0 0.0
        %765 = vmatpush1.msra.mxu0 0.0
        %766 = vmatprep.subr.mxu0 0.0
        %767 = vmatpush1.msra.mxu0 0.0
        %768 = vmatprep.subr.mxu0 0.0
        %769 = vmatpush1.msra.mxu0 0.0
        %770 = vmatprep.subr.mxu0 0.0
        %771 = vmatpush1.msra.mxu0 0.0
        %772 = vmatprep.subr.mxu0 0.0
        %773 = vmatpush1.msra.mxu0 0.0
        %774 = vmatprep.subr.mxu0 0.0
        %775 = vmatpush1.msra.mxu0 0.0
        %776 = vmatprep.subr.mxu0 0.0
        %777 = vmatpush1.msra.mxu0 0.0
        %778 = vmatprep.subr.mxu0 0.0
        %779 = vmatpush1.msra.mxu0 0.0
        %780 = vmatprep.mubr.f32.mxu0 0.0
        %781 = vmatmul.mubr.f32.gmra.mrb[0].mxu0 %v712
        %v782 = vpop.f32.mrb[0].mxu0
        %v783 = vadd.f32 0.0, %v782
        %v784 = vpop.f32.mrb[0].mxu0
        %785 = vdwg.mxu0
        %v786 = vsub.f32 %v552, %v783
        %v787 = vld [vmem:[%s7] sm:$0xf]
        %v789 = vsel %vm556, %v787, 0
        %791 = vmatprep.subr.mxu0 0.0
        %792 = vmatpush1.msra.mxu0 %v714
        %793 = vmatprep.subr.mxu0 0.0
        %794 = vmatpush1.msra.mxu0 0.0
        %795 = vmatprep.subr.mxu0 0.0
        %796 = vmatpush1.msra.mxu0 0.0
        %797 = vmatprep.subr.mxu0 0.0
        %798 = vmatpush1.msra.mxu0 0.0
        %799 = vmatprep.subr.mxu0 0.0
        %800 = vmatpush1.msra.mxu0 0.0
        %801 = vmatprep.subr.mxu0 0.0
        %802 = vmatpush1.msra.mxu0 0.0
        %803 = vmatprep.subr.mxu0 0.0
        %804 = vmatpush1.msra.mxu0 0.0
        %805 = vmatprep.subr.mxu0 0.0
        %806 = vmatpush1.msra.mxu0 0.0
        %807 = vmatprep.subr.mxu0 0.0
        %808 = vmatpush1.msra.mxu0 0.0
        %809 = vmatprep.subr.mxu0 0.0
        %810 = vmatpush1.msra.mxu0 0.0
        %811 = vmatprep.subr.mxu0 0.0
        %812 = vmatpush1.msra.mxu0 0.0
        %813 = vmatprep.subr.mxu0 0.0
        %814 = vmatpush1.msra.mxu0 0.0
        %815 = vmatprep.subr.mxu0 0.0
        %816 = vmatpush1.msra.mxu0 0.0
        %817 = vmatprep.subr.mxu0 0.0
        %818 = vmatpush1.msra.mxu0 0.0
        %819 = vmatprep.subr.mxu0 0.0
        %820 = vmatpush1.msra.mxu0 0.0
        %821 = vmatprep.subr.mxu0 0.0
        %822 = vmatpush1.msra.mxu0 0.0
        %823 = vmatprep.subr.mxu0 0.0
        %824 = vmatpush1.msra.mxu0 0.0
        %825 = vmatprep.subr.mxu0 0.0
        %826 = vmatpush1.msra.mxu0 0.0
        %827 = vmatprep.subr.mxu0 0.0
        %828 = vmatpush1.msra.mxu0 0.0
        %829 = vmatprep.subr.mxu0 0.0
        %830 = vmatpush1.msra.mxu0 0.0
        %831 = vmatprep.subr.mxu0 0.0
        %832 = vmatpush1.msra.mxu0 0.0
        %833 = vmatprep.subr.mxu0 0.0
        %834 = vmatpush1.msra.mxu0 0.0
        %835 = vmatprep.subr.mxu0 0.0
        %836 = vmatpush1.msra.mxu0 0.0
        %837 = vmatprep.subr.mxu0 0.0
        %838 = vmatpush1.msra.mxu0 0.0
        %839 = vmatprep.subr.mxu0 0.0
        %840 = vmatpush1.msra.mxu0 0.0
        %841 = vmatprep.subr.mxu0 0.0
        %842 = vmatpush1.msra.mxu0 0.0
        %843 = vmatprep.subr.mxu0 0.0
        %844 = vmatpush1.msra.mxu0 0.0
        %845 = vmatprep.subr.mxu0 0.0
        %846 = vmatpush1.msra.mxu0 0.0
        %847 = vmatprep.subr.mxu0 0.0
        %848 = vmatpush1.msra.mxu0 0.0
        %849 = vmatprep.subr.mxu0 0.0
        %850 = vmatpush1.msra.mxu0 0.0
        %851 = vmatprep.subr.mxu0 0.0
        %852 = vmatpush1.msra.mxu0 0.0
        %853 = vmatprep.subr.mxu0 0.0
        %854 = vmatpush1.msra.mxu0 0.0
        %855 = vmatprep.mubr.f32.mxu0 0.0
        %856 = vmatmul.mubr.f32.gmra.mrb[0].mxu0 %v789
        %v857 = vpop.f32.mrb[0].mxu0
        %v858 = vadd.f32 0.0, %v857
        %v859 = vpop.f32.mrb[0].mxu0
        %860 = vdwg.mxu0
        %v861 = vsub.f32 %v552, %v858
        %v862 = vmul.f32 %v634, %v634
        %v863 = vmul.f32 %v709, %v709
        %v864 = vadd.f32 %v862, %v863
        %v865 = vmul.f32 %v786, %v786
        %v866 = vadd.f32 %v864, %v865
        %v867 = vmul.f32 %v861, %v861
        %v868 = vadd.f32 %v866, %v867
        %vm869 = vcmask 27648
        %870 = vst.msk [vmem:[%s363] sm:$0xf] %vm869, %v868
        %s871 = sand.u32 %s214, 1
        %s872 = scalar_lea.sflag [#allocation4], %s871
        %s873 = sand.u32 %s214, 1
        %s874 = smul.addr %s873, 4
        %s875 = scalar_lea.vmem [#allocation7], %s874
        // Predicated region
        $region61: #{tpu_custom_call.1} parent=51 // pred_check
          %p876 = pneg %p224
        $region62: #{tpu_custom_call.1} parent=51 // pred_check_branch
          %878 = sbr.rel (%p876) target = $region64
        $region63: #{tpu_custom_call.1} parent=51 // pred_region
          %s880 = ssub.s32 64, 64
          %881 = vsyncadd %s872, %s880
          %s882 = smul.addr %s28, 64
          %s883 = scalar_lea.hbm %s8, %s882
          %s885 = sshll.u32 %s875, 4
          %s886 = int_to_ptr.vmem [resolvable:$true] %s885
          %888 = dma.vmem_to_hbm [thread:$0]  %s886, 64, %s883, %s872
        $region64: #{tpu_custom_call.1} parent=51 // pred_fallthru
          _
      $region52: #{tpu_custom_call.1} parent=5 // pred_fallthru
        _
      %p889 = scmp.le.s32.totalorder 2, %s23
      // Predicated region
      $region65: #{tpu_custom_call.1} parent=5 // pred_check
        %p890 = pneg %p889
      $region66: #{tpu_custom_call.1} parent=5 // pred_check_branch
        %892 = sbr.rel (%p890) target = $region68
      $region67: #{tpu_custom_call.1} parent=5 // pred_region
        %s893 = ssub.s32 %s23, 2
        // Predicated region
        $region69: #{tpu_custom_call.1} parent=67 // pred_check
          %p894 = pneg %p230
        $region70: #{tpu_custom_call.1} parent=67 // pred_check_branch
          %896 = sbr.rel (%p894) target = $region72
        $region71: #{tpu_custom_call.1} parent=67 // pred_region
          %s897 = sand.u32 %s215, 1
          %s898 = scalar_lea.sflag [#allocation4], %s897
          %s899 = sand.u32 %s215, 1
          %s900 = smul.addr %s899, 4
          %s901 = scalar_lea.vmem [#allocation7], %s900
          %902 = dma.done %s898, 64
        $region72: #{tpu_custom_call.1} parent=67 // pred_fallthru
          _
      $region68: #{tpu_custom_call.1} parent=5 // pred_fallthru
        _
    $region6: #{tpu_custom_call.1} parent=1 // loop_footer
      %s27 = sadd.s32 1, %s23
    $region7: #{tpu_custom_call.1} parent=1 // loop_footer_branch
      %22 = sbr.rel target = $region3
    $region8: #{tpu_custom_call.1} parent=1 // loop_exit
      _
    %903 = vsyncpa [#allocation3], 1
    %s904 = scalar_lea.sflag [#allocation3], 1
    %905 = vsyncpa %s904, 1
    %906 = vsyncpa [#allocation6], 1
    %s907 = scalar_lea.sflag [#allocation6], 1
    %908 = vsyncpa %s907, 1
    %909 = vsyncpa [#allocation4], 1
    %s910 = scalar_lea.sflag [#allocation4], 1
    %911 = vsyncpa %s910, 1

</llo_original>
